<compile_context>
chip_gen: v5e
topology: v5e:2x2
jax: 0.10.0
libtpu: 0.0.40
codegen_flags: <defaults>
</compile_context>

<pallas_src>
import functools

import jax
import jax.numpy as jnp
from jax.experimental import pallas as pl
from jax.experimental.pallas import tpu as pltpu

# --- constants (stand-ins for core.constants) ---------------------------------
TARGET_REGRESSION_LABEL_KEY = "target_regression_label"
TARGET_REGRESSION_WEIGHT_KEY = "target_regression_weight"
TARGET_CLASSIFICATION_KEY = "target_classification"
TARGET_VISIBILITY_KEY = "target_visibility"
SIMSIAM_SEARCH_OUT_KEY = "simsiam_search_out"
SIMSIAM_DYNAMIC_OUT_KEY = "simsiam_dynamic_out"
SIMSIAM_NEGATIVE_OUT_KEY = "simsiam_negative_out"

_LANES = 128
_EPS = 1e-8


# --- fused Pallas kernel --------------------------------------------------------
def _fused_loss_kernel(cls_coeff, reg_coeff, hwp, batch,
                       pred_ref, tgt_ref, w_ref,
                       cls_x_ref, cls_y_ref,
                       pres_ref, a_ref, b_ref,
                       out_ref):
    """Computes all SiamABC loss terms in one pass.

    pred/tgt : (B, 4*HWp)  bbox regression; channels live in lane slices
    w        : (B, HWp)    regression weight (padded tail = 0 -> excluded)
    cls_x/y  : (B, HW)     classification logits / labels (native layout)
    pres     : (4B, 1)     visibility flag tiled over the 4 cosine pairs
    a/b      : (4B, D)     SimSiam pairs: a = [p1s|p2s|p1d|p2d],
                                          b = [z2s|z1s|z2d|z1d]
    out      : (1, 128)    lanes 0..4 = [cls*coeff, reg*coeff, sim_search,
                                          sim_dynamic, negative]
    """
    f32 = jnp.float32

    # ---- regression: 1 - IoU, mean over positive positions ---------------------
    p = pred_ref[...].astype(f32)                     # (B, 4*HWp)
    t = tgt_ref[...].astype(f32)
    w = w_ref[...].astype(f32)                        # (B, HWp)
    # Lane-aligned static channel slices (HWp % 128 == 0): zero-cost views.
    p0, p1, p2, p3 = (p[:, 0 * hwp:1 * hwp], p[:, 1 * hwp:2 * hwp],
                      p[:, 2 * hwp:3 * hwp], p[:, 3 * hwp:4 * hwp])
    t0, t1, t2, t3 = (t[:, 0 * hwp:1 * hwp], t[:, 1 * hwp:2 * hwp],
                      t[:, 2 * hwp:3 * hwp], t[:, 3 * hwp:4 * hwp])

    target_area = (t0 + t2) * (t1 + t3)
    pred_area = (p0 + p2) * (p1 + p3)
    w_intersect = jnp.minimum(p0, t0) + jnp.minimum(p2, t2)
    h_intersect = jnp.minimum(p3, t3) + jnp.minimum(p1, t1)
    area_intersect = w_intersect * h_intersect
    area_union = target_area + pred_area - area_intersect
    iou = (area_intersect + 1.0) / (area_union + 1.0)      # exact division
    losses = 1.0 - iou                                      # (B, HWp)

    pos_mask = (w > 0.0).astype(f32)
    # lane-reduce first, then one tiny final reduce
    reg_num_part = jnp.sum(losses * pos_mask, axis=-1, keepdims=True)   # (B, 1)
    reg_den_part = jnp.sum(pos_mask, axis=-1, keepdims=True)            # (B, 1)
    n_pos = jnp.sum(reg_den_part)
    reg_loss = jnp.abs(jnp.sum(reg_num_part) / jnp.maximum(n_pos, 1.0))

    # ---- balanced BCE-with-logits ----------------------------------------------
    x = cls_x_ref[...].astype(f32)                    # (B, HW)
    y = cls_y_ref[...].astype(f32)
    bce = jnp.maximum(x, 0.0) - x * y + jnp.log1p(jnp.exp(-jnp.abs(x)))
    pos = (y == 1.0).astype(f32)
    neg = (y == 0.0).astype(f32)
    bce_pos_part = jnp.sum(bce * pos, axis=-1, keepdims=True)   # (B, 1)
    bce_neg_part = jnp.sum(bce * neg, axis=-1, keepdims=True)
    pos_part = jnp.sum(pos, axis=-1, keepdims=True)
    neg_part = jnp.sum(neg, axis=-1, keepdims=True)
    loss_pos = jnp.sum(bce_pos_part) / jnp.maximum(jnp.sum(pos_part), 1.0)
    loss_neg = jnp.sum(bce_neg_part) / jnp.maximum(jnp.sum(neg_part), 1.0)
    cls_loss = 0.5 * loss_pos + 0.5 * loss_neg

    # ---- SimSiam cosine terms (all 4 pairs in one pass) -------------------------
    a = a_ref[...].astype(f32)                        # (4B, D)
    b = b_ref[...].astype(f32)
    pres = pres_ref[...].astype(f32)                  # (4B, 1)
    pm = (pres == 1.0).astype(f32)
    am = (pres == 0.0).astype(f32)
    n_pres = jnp.sum(pm) * 0.25                       # exact (integer * 4 / 4)
    n_abs = jnp.sum(am) * 0.25

    dot = jnp.sum(a * b, axis=-1, keepdims=True)      # (4B, 1)
    na2 = jnp.sum(a * a, axis=-1, keepdims=True)
    nb2 = jnp.sum(b * b, axis=-1, keepdims=True)
    # per-norm eps clamp (F.cosine_similarity semantics), single rsqrt per row
    denom_sq = jnp.maximum(na2, _EPS * _EPS) * jnp.maximum(nb2, _EPS * _EPS)
    cos = dot * jax.lax.rsqrt(denom_sq)               # (4B, 1)

    # row groups 0..1 = search pairs, 2..3 = dynamic pairs
    row = jax.lax.broadcasted_iota(jnp.int32, (4 * batch, 1), 0)
    search_mask = (row < 2 * batch).astype(f32)
    dyn_mask = 1.0 - search_mask

    cos_p = cos * pm
    ps_search = jnp.sum(cos_p * search_mask)
    ps_dynamic = jnp.sum(cos_p * dyn_mask)
    as_search = jnp.sum(cos * am * search_mask)
    # dynamic-side absent sums intentionally not computed (dead code in ref:
    # cos_dissim_loss_dynamic * 0).

    inv_pres = 1.0 / jnp.maximum(n_pres, 1.0)
    inv_abs = 1.0 / jnp.maximum(n_abs, 1.0)
    # mean1 + mean2 over a pair group == group_sum / n_pres
    cos_sim_search = 0.5 * (1.0 - ps_search * inv_pres * 0.5)
    cos_sim_dynamic = 0.5 * (1.0 - ps_dynamic * inv_pres * 0.5)
    has_abs = (n_abs > 0.0).astype(f32)
    negative = has_abs * (0.25 * (1.0 + as_search * inv_abs * 0.5))

    # ---- pack the 5 final scalars into one lane-dense row and store once --------
    lane = jax.lax.broadcasted_iota(jnp.int32, (1, _LANES), 1)
    out_row = (jnp.where(lane == 0, cls_loss * cls_coeff, 0.0)
               + jnp.where(lane == 1, reg_loss * reg_coeff, 0.0)
               + jnp.where(lane == 2, cos_sim_search, 0.0)
               + jnp.where(lane == 3, cos_sim_dynamic, 0.0)
               + jnp.where(lane == 4, negative, 0.0))
    out_ref[...] = out_row.astype(jnp.float32)


# --- wrapper --------------------------------------------------------------------
def _full_spec(shape):
    zeros = (0,) * len(shape)
    return pl.BlockSpec(shape, lambda i, _z=zeros: _z)


def siamabc_loss(outputs, gt, coeffs):
    bbox_pred = outputs[TARGET_REGRESSION_LABEL_KEY]      # (B, 4, H, W)
    reg_target = gt[TARGET_REGRESSION_LABEL_KEY]          # (B, 4, H, W)
    reg_weight = gt[TARGET_REGRESSION_WEIGHT_KEY]         # (B, 1, H, W)
    cls_pred = outputs[TARGET_CLASSIFICATION_KEY]         # (B, 1, H, W)
    cls_label = gt[TARGET_CLASSIFICATION_KEY]             # (B, 1, H, W)
    visibility = gt[TARGET_VISIBILITY_KEY]                # (B, 1)
    p1s, p2s, z1s, z2s = outputs[SIMSIAM_SEARCH_OUT_KEY]  # 4 x (B, D)
    p1d, p2d, z1d, z2d = outputs[SIMSIAM_DYNAMIC_OUT_KEY]

    B = bbox_pred.shape[0]
    H, W = bbox_pred.shape[-2], bbox_pred.shape[-1]
    HW = H * W
    D = p1s.shape[-1]

    # Pad HW up to a lane multiple so in-kernel channel extraction is a
    # lane-aligned static slice (padded weight = 0 excludes the tail).
    HWp = max(_LANES, -(-HW // _LANES) * _LANES)

    def _pad_hw(x3):  # (B, C, HW) -> (B, C, HWp)
        if HWp == HW:
            return x3
        return jnp.pad(x3, ((0, 0), (0, 0), (0, HWp - HW)))

    # Contiguous reshapes only; native dtype preserved (casts happen in-kernel).
    pred2 = _pad_hw(bbox_pred.reshape(B, 4, HW)).reshape(B, 4 * HWp)
    tgt2 = _pad_hw(reg_target.reshape(B, 4, HW)).reshape(B, 4 * HWp)
    w2 = _pad_hw(reg_weight.reshape(B, 1, HW)).reshape(B, HWp)

    # Classification stays in its natural (B, HW) layout: no padding needed.
    cls_x2 = cls_pred.reshape(B, HW)
    cls_y2 = cls_label.reshape(B, HW)

    # Pack the 8 SimSiam embeddings into two (4B, D) slabs; cosine pairs line
    # up row-wise: (p1s,z2s), (p2s,z1s), (p1d,z2d), (p2d,z1d).
    a_slab = jnp.concatenate([p1s, p2s, p1d, p2d], axis=0)
    b_slab = jnp.concatenate([z2s, z1s, z2d, z1d], axis=0)

    pres4 = jnp.tile(visibility.reshape(B, 1), (4, 1))    # (4B, 1)

    ins = [pred2, tgt2, w2, cls_x2, cls_y2, pres4, a_slab, b_slab]

    cost = pl.CostEstimate(
        flops=int(14 * B * HWp + 10 * B * HW + 8 * 4 * B * D + 256),
        transcendentals=int(2 * B * HW + 4 * B + 16),
        bytes_accessed=int(sum(int(x.size) * x.dtype.itemsize for x in ins)
                           + _LANES * 4),
    )

    kernel = functools.partial(
        _fused_loss_kernel,
        float(coeffs[TARGET_CLASSIFICATION_KEY]),
        float(coeffs[TARGET_REGRESSION_LABEL_KEY]),
        int(HWp),
        int(B),
    )

    # TODO(synk): if B*HW grows large (H=W>=32 or bigger batches), add a
    # "parallel" grid axis over the position dim with per-block partial sums in
    # VMEM scratch and a pl.when(last) finalize so v7x's second TensorCore is
    # used; at the current ~2K positions grid=(1,) is optimal.
    out = pl.pallas_call(
        kernel,
        out_shape=jax.ShapeDtypeStruct((1, _LANES), jnp.float32),
        grid=(1,),
        in_specs=[_full_spec(x.shape) for x in ins],
        out_specs=pl.BlockSpec((1, _LANES), lambda i: (0, 0)),
        compiler_params=pltpu.CompilerParams(
            dimension_semantics=("arbitrary",),
            vmem_limit_bytes=4 * 1024 * 1024,
        ),
        cost_estimate=cost,
    )(*ins)

    res = out[0]
    return {
        TARGET_CLASSIFICATION_KEY: res[0],
        TARGET_REGRESSION_LABEL_KEY: res[1],
        SIMSIAM_SEARCH_OUT_KEY: res[2],
        SIMSIAM_DYNAMIC_OUT_KEY: res[3],
        SIMSIAM_NEGATIVE_OUT_KEY: res[4],
    }


# --- demo -----------------------------------------------------------------------
if __name__ == "__main__":
    key = jax.random.PRNGKey(0)
    ks = jax.random.split(key, 12)

    B, H, W, D = 8, 16, 16, 128

    bbox_pred = jax.random.uniform(ks[0], (B, 4, H, W), jnp.float32, 0.1, 2.0)
    reg_target = jax.random.uniform(ks[1], (B, 4, H, W), jnp.float32, 0.1, 2.0)
    reg_weight = jax.random.bernoulli(ks[2], 0.3, (B, 1, H, W)).astype(jnp.float32)

    cls_pred = jax.random.normal(ks[3], (B, 1, H, W), jnp.float32)
    cls_label = jax.random.bernoulli(ks[4], 0.5, (B, 1, H, W)).astype(jnp.float32)

    visibility = jnp.array([[1.0], [1.0], [0.0], [1.0], [0.0], [1.0], [1.0], [0.0]],
                           dtype=jnp.float32)  # (B, 1)

    p1_s = jax.random.normal(ks[5], (B, D), jnp.float32)
    p2_s = jax.random.normal(ks[6], (B, D), jnp.float32)
    z1_s = jax.random.normal(ks[7], (B, D), jnp.float32)
    z2_s = jax.random.normal(ks[8], (B, D), jnp.float32)
    p1_d = jax.random.normal(ks[9], (B, D), jnp.float32)
    p2_d = jax.random.normal(ks[10], (B, D), jnp.float32)
    z1_d = jax.random.normal(ks[11], (B, D), jnp.float32)
    z2_d = jax.random.normal(jax.random.fold_in(key, 99), (B, D), jnp.float32)

    outputs = {
        TARGET_REGRESSION_LABEL_KEY: bbox_pred,
        TARGET_CLASSIFICATION_KEY: cls_pred,
        SIMSIAM_SEARCH_OUT_KEY: (p1_s, p2_s, z1_s, z2_s),
        SIMSIAM_DYNAMIC_OUT_KEY: (p1_d, p2_d, z1_d, z2_d),
    }
    gt = {
        TARGET_REGRESSION_LABEL_KEY: reg_target,
        TARGET_REGRESSION_WEIGHT_KEY: reg_weight,
        TARGET_CLASSIFICATION_KEY: cls_label,
        TARGET_VISIBILITY_KEY: visibility,
    }
    coeffs = {TARGET_CLASSIFICATION_KEY: 1.0, TARGET_REGRESSION_LABEL_KEY: 3.0}

    result = siamabc_loss(outputs, gt, coeffs)
    jax.block_until_ready(result)
    print("KERNEL_OK")
</pallas_src>

<mosaic_0001>
module attributes {stable_mosaic.version = 11 : i64} {
  func.func @_fused_loss_kernel(%arg0: i32, %arg1: memref<8x1024xf32, #tpu.memory_space<vmem>>, %arg2: memref<8x1024xf32, #tpu.memory_space<vmem>>, %arg3: memref<8x256xf32, #tpu.memory_space<vmem>>, %arg4: memref<8x256xf32, #tpu.memory_space<vmem>>, %arg5: memref<8x256xf32, #tpu.memory_space<vmem>>, %arg6: memref<32x1xf32, #tpu.memory_space<vmem>>, %arg7: memref<32x128xf32, #tpu.memory_space<vmem>>, %arg8: memref<32x128xf32, #tpu.memory_space<vmem>>, %arg9: memref<1x128xf32, #tpu.memory_space<vmem>>) attributes {dimension_semantics = [#tpu.dimension_semantics<arbitrary>], iteration_bounds = array<i64: 1>, scalar_prefetch = 0 : i64, scratch_operands = 0 : i64, tpu.core_type = #tpu.core_type<tc>, window_params = [{pipeline_mode = #tpu.pipeline_mode<synchronous>, transform_indices = @transform_0, window_bounds = array<i64: 8, 1024>}, {pipeline_mode = #tpu.pipeline_mode<synchronous>, transform_indices = @transform_1, window_bounds = array<i64: 8, 1024>}, {pipeline_mode = #tpu.pipeline_mode<synchronous>, transform_indices = @transform_2, window_bounds = array<i64: 8, 256>}, {pipeline_mode = #tpu.pipeline_mode<synchronous>, transform_indices = @transform_3, window_bounds = array<i64: 8, 256>}, {pipeline_mode = #tpu.pipeline_mode<synchronous>, transform_indices = @transform_4, window_bounds = array<i64: 8, 256>}, {pipeline_mode = #tpu.pipeline_mode<synchronous>, transform_indices = @transform_5, window_bounds = array<i64: 32, 1>}, {pipeline_mode = #tpu.pipeline_mode<synchronous>, transform_indices = @transform_6, window_bounds = array<i64: 32, 128>}, {pipeline_mode = #tpu.pipeline_mode<synchronous>, transform_indices = @transform_7, window_bounds = array<i64: 32, 128>}, {pipeline_mode = #tpu.pipeline_mode<synchronous>, transform_indices = @transform_8, window_bounds = array<i64: 1, 128>}]} {
    %c0 = arith.constant 0 : index
    %c0_0 = arith.constant 0 : index
    %0 = vector.load %arg1[%c0, %c0_0] : memref<8x1024xf32, #tpu.memory_space<vmem>>, vector<8x1024xf32>
    %c0_1 = arith.constant 0 : index
    %c0_2 = arith.constant 0 : index
    %1 = vector.load %arg2[%c0_1, %c0_2] : memref<8x1024xf32, #tpu.memory_space<vmem>>, vector<8x1024xf32>
    %c0_3 = arith.constant 0 : index
    %c0_4 = arith.constant 0 : index
    %2 = vector.load %arg3[%c0_3, %c0_4] : memref<8x256xf32, #tpu.memory_space<vmem>>, vector<8x256xf32>
    %3 = vector.extract_strided_slice %0 {offsets = [0, 0], sizes = [8, 256], strides = [1, 1]} : vector<8x1024xf32> to vector<8x256xf32>
    %4 = vector.extract_strided_slice %0 {offsets = [0, 256], sizes = [8, 256], strides = [1, 1]} : vector<8x1024xf32> to vector<8x256xf32>
    %5 = vector.extract_strided_slice %0 {offsets = [0, 512], sizes = [8, 256], strides = [1, 1]} : vector<8x1024xf32> to vector<8x256xf32>
    %6 = vector.extract_strided_slice %0 {offsets = [0, 768], sizes = [8, 256], strides = [1, 1]} : vector<8x1024xf32> to vector<8x256xf32>
    %7 = vector.extract_strided_slice %1 {offsets = [0, 0], sizes = [8, 256], strides = [1, 1]} : vector<8x1024xf32> to vector<8x256xf32>
    %8 = vector.extract_strided_slice %1 {offsets = [0, 256], sizes = [8, 256], strides = [1, 1]} : vector<8x1024xf32> to vector<8x256xf32>
    %9 = vector.extract_strided_slice %1 {offsets = [0, 512], sizes = [8, 256], strides = [1, 1]} : vector<8x1024xf32> to vector<8x256xf32>
    %10 = vector.extract_strided_slice %1 {offsets = [0, 768], sizes = [8, 256], strides = [1, 1]} : vector<8x1024xf32> to vector<8x256xf32>
    %11 = arith.addf %7, %9 : vector<8x256xf32>
    %12 = arith.addf %8, %10 : vector<8x256xf32>
    %13 = arith.mulf %11, %12 : vector<8x256xf32>
    %14 = arith.addf %3, %5 : vector<8x256xf32>
    %15 = arith.addf %4, %6 : vector<8x256xf32>
    %16 = arith.mulf %14, %15 : vector<8x256xf32>
    %17 = arith.minimumf %3, %7 : vector<8x256xf32>
    %18 = arith.minimumf %5, %9 : vector<8x256xf32>
    %19 = arith.addf %17, %18 : vector<8x256xf32>
    %20 = arith.minimumf %6, %10 : vector<8x256xf32>
    %21 = arith.minimumf %4, %8 : vector<8x256xf32>
    %22 = arith.addf %20, %21 : vector<8x256xf32>
    %23 = arith.mulf %19, %22 : vector<8x256xf32>
    %24 = arith.addf %13, %16 : vector<8x256xf32>
    %25 = arith.subf %24, %23 : vector<8x256xf32>
    %cst = arith.constant 1.000000e+00 : f32
    %26 = vector.broadcast %cst : f32 to vector<8x256xf32>
    %27 = arith.addf %23, %26 : vector<8x256xf32>
    %cst_5 = arith.constant 1.000000e+00 : f32
    %28 = vector.broadcast %cst_5 : f32 to vector<8x256xf32>
    %29 = arith.addf %25, %28 : vector<8x256xf32>
    %30 = arith.divf %27, %29 : vector<8x256xf32>
    %cst_6 = arith.constant 1.000000e+00 : f32
    %31 = vector.broadcast %cst_6 : f32 to vector<8x256xf32>
    %32 = arith.subf %31, %30 : vector<8x256xf32>
    %cst_7 = arith.constant 0.000000e+00 : f32
    %33 = vector.broadcast %cst_7 : f32 to vector<8x256xf32>
    %34 = arith.cmpf ogt, %2, %33 : vector<8x256xf32>
    %35 = arith.extui %34 : vector<8x256xi1> to vector<8x256xi32>
    %36 = arith.sitofp %35 : vector<8x256xi32> to vector<8x256xf32>
    %37 = arith.mulf %32, %36 : vector<8x256xf32>
    %cst_8 = arith.constant dense<0.000000e+00> : vector<8xf32>
    %38 = vector.multi_reduction <add>, %37, %cst_8 [1] : vector<8x256xf32> to vector<8xf32>
    %39 = vector.shape_cast %38 : vector<8xf32> to vector<8x1xf32>
    %cst_9 = arith.constant dense<0.000000e+00> : vector<8xf32>
    %40 = vector.multi_reduction <add>, %36, %cst_9 [1] : vector<8x256xf32> to vector<8xf32>
    %41 = vector.shape_cast %40 : vector<8xf32> to vector<8x1xf32>
    %42 = vector.shape_cast %41 : vector<8x1xf32> to vector<1x8x1xf32>
    %cst_10 = arith.constant dense<0.000000e+00> : vector<1xf32>
    %43 = vector.multi_reduction <add>, %42, %cst_10 [1, 2] : vector<1x8x1xf32> to vector<1xf32>
    %44 = vector.shape_cast %43 : vector<1xf32> to vector<1x1x1xf32>
    %45 = vector.extract %44[0, 0, 0] : f32 from vector<1x1x1xf32>
    %46 = vector.shape_cast %39 : vector<8x1xf32> to vector<1x8x1xf32>
    %cst_11 = arith.constant dense<0.000000e+00> : vector<1xf32>
    %47 = vector.multi_reduction <add>, %46, %cst_11 [1, 2] : vector<1x8x1xf32> to vector<1xf32>
    %48 = vector.shape_cast %47 : vector<1xf32> to vector<1x1x1xf32>
    %49 = vector.extract %48[0, 0, 0] : f32 from vector<1x1x1xf32>
    %cst_12 = arith.constant 1.000000e+00 : f32
    %50 = arith.maximumf %45, %cst_12 : f32
    %51 = arith.divf %49, %50 : f32
    %52 = math.absf %51 : f32
    %c0_13 = arith.constant 0 : index
    %c0_14 = arith.constant 0 : index
    %53 = vector.load %arg4[%c0_13, %c0_14] : memref<8x256xf32, #tpu.memory_space<vmem>>, vector<8x256xf32>
    %c0_15 = arith.constant 0 : index
    %c0_16 = arith.constant 0 : index
    %54 = vector.load %arg5[%c0_15, %c0_16] : memref<8x256xf32, #tpu.memory_space<vmem>>, vector<8x256xf32>
    %cst_17 = arith.constant 0.000000e+00 : f32
    %55 = vector.broadcast %cst_17 : f32 to vector<8x256xf32>
    %56 = arith.maximumf %53, %55 : vector<8x256xf32>
    %57 = arith.mulf %53, %54 : vector<8x256xf32>
    %58 = arith.subf %56, %57 : vector<8x256xf32>
    %59 = math.absf %53 : vector<8x256xf32>
    %cst_18 = arith.constant 0.000000e+00 : f32
    %60 = vector.broadcast %cst_18 : f32 to vector<8x256xf32>
    %61 = arith.subf %60, %59 : vector<8x256xf32>
    %62 = math.exp %61 : vector<8x256xf32>
    %63 = math.log1p %62 : vector<8x256xf32>
    %64 = arith.addf %58, %63 : vector<8x256xf32>
    %cst_19 = arith.constant 1.000000e+00 : f32
    %65 = vector.broadcast %cst_19 : f32 to vector<8x256xf32>
    %66 = arith.cmpf oeq, %54, %65 : vector<8x256xf32>
    %67 = arith.extui %66 : vector<8x256xi1> to vector<8x256xi32>
    %68 = arith.sitofp %67 : vector<8x256xi32> to vector<8x256xf32>
    %cst_20 = arith.constant 0.000000e+00 : f32
    %69 = vector.broadcast %cst_20 : f32 to vector<8x256xf32>
    %70 = arith.cmpf oeq, %54, %69 : vector<8x256xf32>
    %71 = arith.extui %70 : vector<8x256xi1> to vector<8x256xi32>
    %72 = arith.sitofp %71 : vector<8x256xi32> to vector<8x256xf32>
    %73 = arith.mulf %64, %68 : vector<8x256xf32>
    %cst_21 = arith.constant dense<0.000000e+00> : vector<8xf32>
    %74 = vector.multi_reduction <add>, %73, %cst_21 [1] : vector<8x256xf32> to vector<8xf32>
    %75 = vector.shape_cast %74 : vector<8xf32> to vector<8x1xf32>
    %76 = arith.mulf %64, %72 : vector<8x256xf32>
    %cst_22 = arith.constant dense<0.000000e+00> : vector<8xf32>
    %77 = vector.multi_reduction <add>, %76, %cst_22 [1] : vector<8x256xf32> to vector<8xf32>
    %78 = vector.shape_cast %77 : vector<8xf32> to vector<8x1xf32>
    %cst_23 = arith.constant dense<0.000000e+00> : vector<8xf32>
    %79 = vector.multi_reduction <add>, %68, %cst_23 [1] : vector<8x256xf32> to vector<8xf32>
    %80 = vector.shape_cast %79 : vector<8xf32> to vector<8x1xf32>
    %cst_24 = arith.constant dense<0.000000e+00> : vector<8xf32>
    %81 = vector.multi_reduction <add>, %72, %cst_24 [1] : vector<8x256xf32> to vector<8xf32>
    %82 = vector.shape_cast %81 : vector<8xf32> to vector<8x1xf32>
    %83 = vector.shape_cast %75 : vector<8x1xf32> to vector<1x8x1xf32>
    %cst_25 = arith.constant dense<0.000000e+00> : vector<1xf32>
    %84 = vector.multi_reduction <add>, %83, %cst_25 [1, 2] : vector<1x8x1xf32> to vector<1xf32>
    %85 = vector.shape_cast %84 : vector<1xf32> to vector<1x1x1xf32>
    %86 = vector.extract %85[0, 0, 0] : f32 from vector<1x1x1xf32>
    %87 = vector.shape_cast %80 : vector<8x1xf32> to vector<1x8x1xf32>
    %cst_26 = arith.constant dense<0.000000e+00> : vector<1xf32>
    %88 = vector.multi_reduction <add>, %87, %cst_26 [1, 2] : vector<1x8x1xf32> to vector<1xf32>
    %89 = vector.shape_cast %88 : vector<1xf32> to vector<1x1x1xf32>
    %90 = vector.extract %89[0, 0, 0] : f32 from vector<1x1x1xf32>
    %cst_27 = arith.constant 1.000000e+00 : f32
    %91 = arith.maximumf %90, %cst_27 : f32
    %92 = arith.divf %86, %91 : f32
    %93 = vector.shape_cast %78 : vector<8x1xf32> to vector<1x8x1xf32>
    %cst_28 = arith.constant dense<0.000000e+00> : vector<1xf32>
    %94 = vector.multi_reduction <add>, %93, %cst_28 [1, 2] : vector<1x8x1xf32> to vector<1xf32>
    %95 = vector.shape_cast %94 : vector<1xf32> to vector<1x1x1xf32>
    %96 = vector.extract %95[0, 0, 0] : f32 from vector<1x1x1xf32>
    %97 = vector.shape_cast %82 : vector<8x1xf32> to vector<1x8x1xf32>
    %cst_29 = arith.constant dense<0.000000e+00> : vector<1xf32>
    %98 = vector.multi_reduction <add>, %97, %cst_29 [1, 2] : vector<1x8x1xf32> to vector<1xf32>
    %99 = vector.shape_cast %98 : vector<1xf32> to vector<1x1x1xf32>
    %100 = vector.extract %99[0, 0, 0] : f32 from vector<1x1x1xf32>
    %cst_30 = arith.constant 1.000000e+00 : f32
    %101 = arith.maximumf %100, %cst_30 : f32
    %102 = arith.divf %96, %101 : f32
    %cst_31 = arith.constant 5.000000e-01 : f32
    %103 = arith.mulf %cst_31, %92 : f32
    %cst_32 = arith.constant 5.000000e-01 : f32
    %104 = arith.mulf %cst_32, %102 : f32
    %105 = arith.addf %103, %104 : f32
    %c0_33 = arith.constant 0 : index
    %c0_34 = arith.constant 0 : index
    %106 = vector.load %arg7[%c0_33, %c0_34] : memref<32x128xf32, #tpu.memory_space<vmem>>, vector<32x128xf32>
    %c0_35 = arith.constant 0 : index
    %c0_36 = arith.constant 0 : index
    %107 = vector.load %arg8[%c0_35, %c0_36] : memref<32x128xf32, #tpu.memory_space<vmem>>, vector<32x128xf32>
    %c0_37 = arith.constant 0 : index
    %c0_38 = arith.constant 0 : index
    %108 = vector.load %arg6[%c0_37, %c0_38] : memref<32x1xf32, #tpu.memory_space<vmem>>, vector<32x1xf32>
    %cst_39 = arith.constant 1.000000e+00 : f32
    %109 = vector.broadcast %cst_39 : f32 to vector<32x1xf32>
    %110 = arith.cmpf oeq, %108, %109 : vector<32x1xf32>
    %111 = arith.extui %110 : vector<32x1xi1> to vector<32x1xi32>
    %112 = arith.sitofp %111 : vector<32x1xi32> to vector<32x1xf32>
    %cst_40 = arith.constant 0.000000e+00 : f32
    %113 = vector.broadcast %cst_40 : f32 to vector<32x1xf32>
    %114 = arith.cmpf oeq, %108, %113 : vector<32x1xf32>
    %115 = arith.extui %114 : vector<32x1xi1> to vector<32x1xi32>
    %116 = arith.sitofp %115 : vector<32x1xi32> to vector<32x1xf32>
    %117 = vector.shape_cast %112 : vector<32x1xf32> to vector<1x32x1xf32>
    %cst_41 = arith.constant dense<0.000000e+00> : vector<1xf32>
    %118 = vector.multi_reduction <add>, %117, %cst_41 [1, 2] : vector<1x32x1xf32> to vector<1xf32>
    %119 = vector.shape_cast %118 : vector<1xf32> to vector<1x1x1xf32>
    %120 = vector.extract %119[0, 0, 0] : f32 from vector<1x1x1xf32>
    %cst_42 = arith.constant 2.500000e-01 : f32
    %121 = arith.mulf %120, %cst_42 : f32
    %122 = vector.shape_cast %116 : vector<32x1xf32> to vector<1x32x1xf32>
    %cst_43 = arith.constant dense<0.000000e+00> : vector<1xf32>
    %123 = vector.multi_reduction <add>, %122, %cst_43 [1, 2] : vector<1x32x1xf32> to vector<1xf32>
    %124 = vector.shape_cast %123 : vector<1xf32> to vector<1x1x1xf32>
    %125 = vector.extract %124[0, 0, 0] : f32 from vector<1x1x1xf32>
    %cst_44 = arith.constant 2.500000e-01 : f32
    %126 = arith.mulf %125, %cst_44 : f32
    %127 = arith.mulf %106, %107 : vector<32x128xf32>
    %cst_45 = arith.constant dense<0.000000e+00> : vector<32xf32>
    %128 = vector.multi_reduction <add>, %127, %cst_45 [1] : vector<32x128xf32> to vector<32xf32>
    %129 = vector.shape_cast %128 : vector<32xf32> to vector<32x1xf32>
    %130 = arith.mulf %106, %106 : vector<32x128xf32>
    %cst_46 = arith.constant dense<0.000000e+00> : vector<32xf32>
    %131 = vector.multi_reduction <add>, %130, %cst_46 [1] : vector<32x128xf32> to vector<32xf32>
    %132 = vector.shape_cast %131 : vector<32xf32> to vector<32x1xf32>
    %133 = arith.mulf %107, %107 : vector<32x128xf32>
    %cst_47 = arith.constant dense<0.000000e+00> : vector<32xf32>
    %134 = vector.multi_reduction <add>, %133, %cst_47 [1] : vector<32x128xf32> to vector<32xf32>
    %135 = vector.shape_cast %134 : vector<32xf32> to vector<32x1xf32>
    %cst_48 = arith.constant 1.000000e-16 : f32
    %136 = vector.broadcast %cst_48 : f32 to vector<32x1xf32>
    %137 = arith.maximumf %132, %136 : vector<32x1xf32>
    %cst_49 = arith.constant 1.000000e-16 : f32
    %138 = vector.broadcast %cst_49 : f32 to vector<32x1xf32>
    %139 = arith.maximumf %135, %138 : vector<32x1xf32>
    %140 = arith.mulf %137, %139 : vector<32x1xf32>
    %141 = math.rsqrt %140 : vector<32x1xf32>
    %142 = arith.mulf %129, %141 : vector<32x1xf32>
    %143 = tpu.iota {dimensions = array<i32: 0>} : vector<32x1xi32>
    %c16_i32 = arith.constant 16 : i32
    %144 = vector.broadcast %c16_i32 : i32 to vector<32x1xi32>
    %145 = arith.cmpi slt, %143, %144 : vector<32x1xi32>
    %146 = arith.extui %145 : vector<32x1xi1> to vector<32x1xi32>
    %147 = arith.sitofp %146 : vector<32x1xi32> to vector<32x1xf32>
    %cst_50 = arith.constant 1.000000e+00 : f32
    %148 = vector.broadcast %cst_50 : f32 to vector<32x1xf32>
    %149 = arith.subf %148, %147 : vector<32x1xf32>
    %150 = arith.mulf %142, %112 : vector<32x1xf32>
    %151 = arith.mulf %150, %147 : vector<32x1xf32>
    %152 = vector.shape_cast %151 : vector<32x1xf32> to vector<1x32x1xf32>
    %cst_51 = arith.constant dense<0.000000e+00> : vector<1xf32>
    %153 = vector.multi_reduction <add>, %152, %cst_51 [1, 2] : vector<1x32x1xf32> to vector<1xf32>
    %154 = vector.shape_cast %153 : vector<1xf32> to vector<1x1x1xf32>
    %155 = vector.extract %154[0, 0, 0] : f32 from vector<1x1x1xf32>
    %156 = arith.mulf %150, %149 : vector<32x1xf32>
    %157 = vector.shape_cast %156 : vector<32x1xf32> to vector<1x32x1xf32>
    %cst_52 = arith.constant dense<0.000000e+00> : vector<1xf32>
    %158 = vector.multi_reduction <add>, %157, %cst_52 [1, 2] : vector<1x32x1xf32> to vector<1xf32>
    %159 = vector.shape_cast %158 : vector<1xf32> to vector<1x1x1xf32>
    %160 = vector.extract %159[0, 0, 0] : f32 from vector<1x1x1xf32>
    %161 = arith.mulf %142, %116 : vector<32x1xf32>
    %162 = arith.mulf %161, %147 : vector<32x1xf32>
    %163 = vector.shape_cast %162 : vector<32x1xf32> to vector<1x32x1xf32>
    %cst_53 = arith.constant dense<0.000000e+00> : vector<1xf32>
    %164 = vector.multi_reduction <add>, %163, %cst_53 [1, 2] : vector<1x32x1xf32> to vector<1xf32>
    %165 = vector.shape_cast %164 : vector<1xf32> to vector<1x1x1xf32>
    %166 = vector.extract %165[0, 0, 0] : f32 from vector<1x1x1xf32>
    %cst_54 = arith.constant 1.000000e+00 : f32
    %167 = arith.maximumf %121, %cst_54 : f32
    %cst_55 = arith.constant 1.000000e+00 : f32
    %168 = arith.divf %cst_55, %167 : f32
    %cst_56 = arith.constant 1.000000e+00 : f32
    %169 = arith.maximumf %126, %cst_56 : f32
    %cst_57 = arith.constant 1.000000e+00 : f32
    %170 = arith.divf %cst_57, %169 : f32
    %171 = arith.mulf %155, %168 : f32
    %cst_58 = arith.constant 5.000000e-01 : f32
    %172 = arith.mulf %171, %cst_58 : f32
    %cst_59 = arith.constant 1.000000e+00 : f32
    %173 = arith.subf %cst_59, %172 : f32
    %cst_60 = arith.constant 5.000000e-01 : f32
    %174 = arith.mulf %cst_60, %173 : f32
    %175 = arith.mulf %160, %168 : f32
    %cst_61 = arith.constant 5.000000e-01 : f32
    %176 = arith.mulf %175, %cst_61 : f32
    %cst_62 = arith.constant 1.000000e+00 : f32
    %177 = arith.subf %cst_62, %176 : f32
    %cst_63 = arith.constant 5.000000e-01 : f32
    %178 = arith.mulf %cst_63, %177 : f32
    %cst_64 = arith.constant 0.000000e+00 : f32
    %179 = arith.cmpf ogt, %126, %cst_64 : f32
    %180 = arith.extui %179 : i1 to i32
    %181 = arith.sitofp %180 : i32 to f32
    %182 = arith.mulf %166, %170 : f32
    %cst_65 = arith.constant 5.000000e-01 : f32
    %183 = arith.mulf %182, %cst_65 : f32
    %cst_66 = arith.constant 1.000000e+00 : f32
    %184 = arith.addf %cst_66, %183 : f32
    %cst_67 = arith.constant 2.500000e-01 : f32
    %185 = arith.mulf %cst_67, %184 : f32
    %186 = arith.mulf %181, %185 : f32
    %187 = tpu.iota {dimensions = array<i32: 1>} : vector<1x128xi32>
    %c0_i32 = arith.constant 0 : i32
    %188 = vector.broadcast %c0_i32 : i32 to vector<1x128xi32>
    %189 = arith.cmpi eq, %187, %188 : vector<1x128xi32>
    %cst_68 = arith.constant 1.000000e+00 : f32
    %190 = arith.mulf %105, %cst_68 : f32
    %cst_69 = arith.constant 0.000000e+00 : f32
    %191 = vector.broadcast %190 : f32 to vector<1x128xf32>
    %192 = vector.broadcast %cst_69 : f32 to vector<1x128xf32>
    %193 = arith.select %189, %191, %192 : vector<1x128xi1>, vector<1x128xf32>
    %c1_i32 = arith.constant 1 : i32
    %194 = vector.broadcast %c1_i32 : i32 to vector<1x128xi32>
    %195 = arith.cmpi eq, %187, %194 : vector<1x128xi32>
    %cst_70 = arith.constant 3.000000e+00 : f32
    %196 = arith.mulf %52, %cst_70 : f32
    %cst_71 = arith.constant 0.000000e+00 : f32
    %197 = vector.broadcast %196 : f32 to vector<1x128xf32>
    %198 = vector.broadcast %cst_71 : f32 to vector<1x128xf32>
    %199 = arith.select %195, %197, %198 : vector<1x128xi1>, vector<1x128xf32>
    %200 = arith.addf %193, %199 : vector<1x128xf32>
    %c2_i32 = arith.constant 2 : i32
    %201 = vector.broadcast %c2_i32 : i32 to vector<1x128xi32>
    %202 = arith.cmpi eq, %187, %201 : vector<1x128xi32>
    %cst_72 = arith.constant 0.000000e+00 : f32
    %203 = vector.broadcast %174 : f32 to vector<1x128xf32>
    %204 = vector.broadcast %cst_72 : f32 to vector<1x128xf32>
    %205 = arith.select %202, %203, %204 : vector<1x128xi1>, vector<1x128xf32>
    %206 = arith.addf %200, %205 : vector<1x128xf32>
    %c3_i32 = arith.constant 3 : i32
    %207 = vector.broadcast %c3_i32 : i32 to vector<1x128xi32>
    %208 = arith.cmpi eq, %187, %207 : vector<1x128xi32>
    %cst_73 = arith.constant 0.000000e+00 : f32
    %209 = vector.broadcast %178 : f32 to vector<1x128xf32>
    %210 = vector.broadcast %cst_73 : f32 to vector<1x128xf32>
    %211 = arith.select %208, %209, %210 : vector<1x128xi1>, vector<1x128xf32>
    %212 = arith.addf %206, %211 : vector<1x128xf32>
    %c4_i32 = arith.constant 4 : i32
    %213 = vector.broadcast %c4_i32 : i32 to vector<1x128xi32>
    %214 = arith.cmpi eq, %187, %213 : vector<1x128xi32>
    %cst_74 = arith.constant 0.000000e+00 : f32
    %215 = vector.broadcast %186 : f32 to vector<1x128xf32>
    %216 = vector.broadcast %cst_74 : f32 to vector<1x128xf32>
    %217 = arith.select %214, %215, %216 : vector<1x128xi1>, vector<1x128xf32>
    %218 = arith.addf %212, %217 : vector<1x128xf32>
    %c0_75 = arith.constant 0 : index
    %c0_76 = arith.constant 0 : index
    %219 = vector.load %arg9[%c0_75, %c0_76] : memref<1x128xf32, #tpu.memory_space<vmem>>, vector<1x128xf32>
    tpu.vector_store %arg9[%c0_75, %c0_76], %218 {strides = array<i32>} : memref<1x128xf32, #tpu.memory_space<vmem>>, vector<1x128xf32>,
    return
  }
  func.func @transform_0(%arg0: i32) -> (i32, i32) {
    %c0_i32 = arith.constant 0 : i32
    %c0_i32_0 = arith.constant 0 : i32
    %c0_i32_1 = arith.constant 0 : i32
    return %c0_i32, %c0_i32_0 : i32, i32
  }
  func.func @transform_1(%arg0: i32) -> (i32, i32) {
    %c0_i32 = arith.constant 0 : i32
    %c0_i32_0 = arith.constant 0 : i32
    %c0_i32_1 = arith.constant 0 : i32
    return %c0_i32, %c0_i32_0 : i32, i32
  }
  func.func @transform_2(%arg0: i32) -> (i32, i32) {
    %c0_i32 = arith.constant 0 : i32
    %c0_i32_0 = arith.constant 0 : i32
    %c0_i32_1 = arith.constant 0 : i32
    return %c0_i32, %c0_i32_0 : i32, i32
  }
  func.func @transform_3(%arg0: i32) -> (i32, i32) {
    %c0_i32 = arith.constant 0 : i32
    %c0_i32_0 = arith.constant 0 : i32
    %c0_i32_1 = arith.constant 0 : i32
    return %c0_i32, %c0_i32_0 : i32, i32
  }
  func.func @transform_4(%arg0: i32) -> (i32, i32) {
    %c0_i32 = arith.constant 0 : i32
    %c0_i32_0 = arith.constant 0 : i32
    %c0_i32_1 = arith.constant 0 : i32
    return %c0_i32, %c0_i32_0 : i32, i32
  }
  func.func @transform_5(%arg0: i32) -> (i32, i32) {
    %c0_i32 = arith.constant 0 : i32
    %c0_i32_0 = arith.constant 0 : i32
    %c0_i32_1 = arith.constant 0 : i32
    return %c0_i32, %c0_i32_0 : i32, i32
  }
  func.func @transform_6(%arg0: i32) -> (i32, i32) {
    %c0_i32 = arith.constant 0 : i32
    %c0_i32_0 = arith.constant 0 : i32
    %c0_i32_1 = arith.constant 0 : i32
    return %c0_i32, %c0_i32_0 : i32, i32
  }
  func.func @transform_7(%arg0: i32) -> (i32, i32) {
    %c0_i32 = arith.constant 0 : i32
    %c0_i32_0 = arith.constant 0 : i32
    %c0_i32_1 = arith.constant 0 : i32
    return %c0_i32, %c0_i32_0 : i32, i32
  }
  func.func @transform_8(%arg0: i32) -> (i32, i32) {
    %c0_i32 = arith.constant 0 : i32
    %c0_i32_0 = arith.constant 0 : i32
    %c0_i32_1 = arith.constant 0 : i32
    return %c0_i32, %c0_i32_0 : i32, i32
  }
}

</mosaic_0001>

<llo_original>
// kernel: tpu_custom_call.1
$region0: #{tpu_custom_call.1}
  #allocation0 [shape = 'u32[]', space=smem, size = 0x4, offset = 0x4, fixed_abs, tag = 'smem constant byte address 0x4 - core index']
  #allocation1 [shape = 'u32[72,128]{1,0:T(1,128)}', space=vmem, size = 0x9000, scoped, tag = 'internal scratch']
  %s0 = inlined_call_operand.hbm [shape: f32[8,1024], index: 0, kind: input, shape index: {}]
  %s1 = inlined_call_operand.hbm [shape: f32[8,1024], index: 1, kind: input, shape index: {}]
  %s2 = inlined_call_operand.hbm [shape: f32[8,256], index: 2, kind: input, shape index: {}]
  %s3 = inlined_call_operand.hbm [shape: f32[8,256], index: 3, kind: input, shape index: {}]
  %s4 = inlined_call_operand.hbm [shape: f32[8,256], index: 4, kind: input, shape index: {}]
  %s5 = inlined_call_operand.vmem [shape: f32[32,1], index: 5, kind: input, shape index: {}]
  %s6 = inlined_call_operand.vmem [shape: f32[32,128], index: 6, kind: input, shape index: {}]
  %s7 = inlined_call_operand.hbm [shape: f32[32,128], index: 7, kind: input, shape index: {}]
  %s8 = inlined_call_operand.hbm [shape: f32[1,128], index: 8, kind: output, shape index: {}]
  %s9 = sld [smem:[#allocation0]]
  $region66: #{tpu_custom_call.1} parent=0
    _
  %s11 = ssub.s32 1, %s9
  %s12 = scalar_select 0, %s11, %s9
  $region1: #{tpu_custom_call.1} parent=0
    #allocation2 [shape = 'u8[32768]{0}', space=vmem, size = 0x8000, scoped, tag = 'input window, operand 0, single buffered']
    #allocation3 [shape = 's32[1]{0}', space=sflag, size = 0x4, scoped, tag = 'scoped memory for tpu_custom_call.1']
    #allocation4 [shape = 's32[1]{0}', space=sflag, size = 0x4, scoped, tag = 'scoped memory for tpu_custom_call.1']
    #allocation5 [shape = 'u8[32768]{0}', space=vmem, size = 0x8000, scoped, tag = 'input window, operand 1, single buffered']
    #allocation6 [shape = 's32[1]{0}', space=sflag, size = 0x4, scoped, tag = 'scoped memory for tpu_custom_call.1']
    #allocation7 [shape = 'u8[8192]{0}', space=vmem, size = 0x2000, scoped, tag = 'input window, operand 2, single buffered']
    #allocation8 [shape = 'u8[8192]{0}', space=vmem, size = 0x2000, scoped, tag = 'input window, operand 3, single buffered']
    #allocation9 [shape = 's32[1]{0}', space=sflag, size = 0x4, scoped, tag = 'scoped memory for tpu_custom_call.1']
    #allocation10 [shape = 'u8[8192]{0}', space=vmem, size = 0x2000, scoped, tag = 'input window, operand 4, single buffered']
    #allocation11 [shape = 'u8[16384]{0}', space=vmem, size = 0x4000, scoped, tag = 'input window, operand 7, single buffered']
    #allocation12 [shape = 's32[1]{0}', space=sflag, size = 0x4, scoped, tag = 'scoped memory for tpu_custom_call.1']
    #allocation13 [shape = 'u8[512]{0}', space=vmem, size = 0x400, scoped, tag = 'output window, operand 0, single buffered']
    %13 = vsyncpa [#allocation3], 0
    %14 = vsyncpa [#allocation6], 0
    %15 = vsyncpa [#allocation9], 0
    %16 = vsyncpa [#allocation12], 0
    %17 = vsyncpa [#allocation4], 0
    // Predicated region
    $region2: #{tpu_custom_call.1} parent=1 // pred_check
      _
    $region3: #{tpu_custom_call.1} parent=1 // pred_check_branch
      %19 = sbr.rel (0) target = $region5
    $region4: #{tpu_custom_call.1} parent=1 // pred_region
      %21 = vsyncadd [#allocation3], 0
      %s23 = sshll.u32 %s0, 4
      %s24 = int_to_ptr.hbm [resolvable:$true] %s23
      %s25 = sshll.u32 [#allocation2], 4
      %s26 = int_to_ptr.vmem [resolvable:$true] %s25
      %28 = dma.hbm_to_vmem [thread:$0]  %s24, 1024, %s26, [#allocation3]
    $region5: #{tpu_custom_call.1} parent=1 // pred_fallthru
      _
    // Predicated region
    $region6: #{tpu_custom_call.1} parent=1 // pred_check
      _
    $region7: #{tpu_custom_call.1} parent=1 // pred_check_branch
      %30 = sbr.rel (0) target = $region9
    $region8: #{tpu_custom_call.1} parent=1 // pred_region
      %32 = vsyncadd [#allocation6], 0
      %s34 = sshll.u32 %s1, 4
      %s35 = int_to_ptr.hbm [resolvable:$true] %s34
      %s36 = sshll.u32 [#allocation5], 4
      %s37 = int_to_ptr.vmem [resolvable:$true] %s36
      %39 = dma.hbm_to_vmem [thread:$0]  %s35, 1024, %s37, [#allocation6]
    $region9: #{tpu_custom_call.1} parent=1 // pred_fallthru
      _
    // Predicated region
    $region10: #{tpu_custom_call.1} parent=1 // pred_check
      _
    $region11: #{tpu_custom_call.1} parent=1 // pred_check_branch
      %41 = sbr.rel (0) target = $region13
    $region12: #{tpu_custom_call.1} parent=1 // pred_region
      %43 = vsyncadd [#allocation6], 0
      %s45 = sshll.u32 %s2, 4
      %s46 = int_to_ptr.hbm [resolvable:$true] %s45
      %s47 = sshll.u32 [#allocation7], 4
      %s48 = int_to_ptr.vmem [resolvable:$true] %s47
      %50 = dma.hbm_to_vmem [thread:$0]  %s46, 256, %s48, [#allocation6]
    $region13: #{tpu_custom_call.1} parent=1 // pred_fallthru
      _
    // Predicated region
    $region14: #{tpu_custom_call.1} parent=1 // pred_check
      _
    $region15: #{tpu_custom_call.1} parent=1 // pred_check_branch
      %52 = sbr.rel (0) target = $region17
    $region16: #{tpu_custom_call.1} parent=1 // pred_region
      %54 = vsyncadd [#allocation9], 0
      %s56 = sshll.u32 %s3, 4
      %s57 = int_to_ptr.hbm [resolvable:$true] %s56
      %s58 = sshll.u32 [#allocation8], 4
      %s59 = int_to_ptr.vmem [resolvable:$true] %s58
      %61 = dma.hbm_to_vmem [thread:$0]  %s57, 256, %s59, [#allocation9]
    $region17: #{tpu_custom_call.1} parent=1 // pred_fallthru
      _
    // Predicated region
    $region18: #{tpu_custom_call.1} parent=1 // pred_check
      _
    $region19: #{tpu_custom_call.1} parent=1 // pred_check_branch
      %63 = sbr.rel (0) target = $region21
    $region20: #{tpu_custom_call.1} parent=1 // pred_region
      %65 = vsyncadd [#allocation9], 0
      %s67 = sshll.u32 %s4, 4
      %s68 = int_to_ptr.hbm [resolvable:$true] %s67
      %s69 = sshll.u32 [#allocation10], 4
      %s70 = int_to_ptr.vmem [resolvable:$true] %s69
      %72 = dma.hbm_to_vmem [thread:$0]  %s68, 256, %s70, [#allocation9]
    $region21: #{tpu_custom_call.1} parent=1 // pred_fallthru
      _
    // Predicated region
    $region22: #{tpu_custom_call.1} parent=1 // pred_check
      _
    $region23: #{tpu_custom_call.1} parent=1 // pred_check_branch
      %74 = sbr.rel (0) target = $region25
    $region24: #{tpu_custom_call.1} parent=1 // pred_region
      _
    $region25: #{tpu_custom_call.1} parent=1 // pred_fallthru
      _
    // Predicated region
    $region26: #{tpu_custom_call.1} parent=1 // pred_check
      _
    $region27: #{tpu_custom_call.1} parent=1 // pred_check_branch
      %76 = sbr.rel (0) target = $region29
    $region28: #{tpu_custom_call.1} parent=1 // pred_region
      _
    $region29: #{tpu_custom_call.1} parent=1 // pred_fallthru
      _
    // Predicated region
    $region30: #{tpu_custom_call.1} parent=1 // pred_check
      _
    $region31: #{tpu_custom_call.1} parent=1 // pred_check_branch
      %78 = sbr.rel (0) target = $region33
    $region32: #{tpu_custom_call.1} parent=1 // pred_region
      %80 = vsyncadd [#allocation12], 0
      %s81 = sshll.u32 %s7, 4
      %s82 = int_to_ptr.hbm [resolvable:$true] %s81
      %s83 = sshll.u32 [#allocation11], 4
      %s84 = int_to_ptr.vmem [resolvable:$true] %s83
      %89 = dma.hbm_to_vmem [thread:$0]  %s82, 512, %s84, [#allocation12], 128, 128, 8
    $region33: #{tpu_custom_call.1} parent=1 // pred_fallthru
      _
    // Predicated region
    $region34: #{tpu_custom_call.1} parent=1 // pred_check
      _
    $region35: #{tpu_custom_call.1} parent=1 // pred_check_branch
      %91 = sbr.rel (0) target = $region37
    $region36: #{tpu_custom_call.1} parent=1 // pred_region
      %93 = dma.done [#allocation3], 1024
    $region37: #{tpu_custom_call.1} parent=1 // pred_fallthru
      _
    // Predicated region
    $region38: #{tpu_custom_call.1} parent=1 // pred_check
      _
    $region39: #{tpu_custom_call.1} parent=1 // pred_check_branch
      %95 = sbr.rel (0) target = $region41
    $region40: #{tpu_custom_call.1} parent=1 // pred_region
      %97 = dma.done [#allocation6], 1024
    $region41: #{tpu_custom_call.1} parent=1 // pred_fallthru
      _
    // Predicated region
    $region42: #{tpu_custom_call.1} parent=1 // pred_check
      _
    $region43: #{tpu_custom_call.1} parent=1 // pred_check_branch
      %99 = sbr.rel (0) target = $region45
    $region44: #{tpu_custom_call.1} parent=1 // pred_region
      %101 = dma.done [#allocation6], 256
    $region45: #{tpu_custom_call.1} parent=1 // pred_fallthru
      _
    // Predicated region
    $region46: #{tpu_custom_call.1} parent=1 // pred_check
      _
    $region47: #{tpu_custom_call.1} parent=1 // pred_check_branch
      %103 = sbr.rel (0) target = $region49
    $region48: #{tpu_custom_call.1} parent=1 // pred_region
      %105 = dma.done [#allocation9], 256
    $region49: #{tpu_custom_call.1} parent=1 // pred_fallthru
      _
    // Predicated region
    $region50: #{tpu_custom_call.1} parent=1 // pred_check
      _
    $region51: #{tpu_custom_call.1} parent=1 // pred_check_branch
      %107 = sbr.rel (0) target = $region53
    $region52: #{tpu_custom_call.1} parent=1 // pred_region
      %109 = dma.done [#allocation9], 256
    $region53: #{tpu_custom_call.1} parent=1 // pred_fallthru
      _
    // Predicated region
    $region54: #{tpu_custom_call.1} parent=1 // pred_check
      _
    $region55: #{tpu_custom_call.1} parent=1 // pred_check_branch
      %111 = sbr.rel (0) target = $region57
    $region56: #{tpu_custom_call.1} parent=1 // pred_region
      %113 = dma.done [#allocation12], 512
    $region57: #{tpu_custom_call.1} parent=1 // pred_fallthru
      _
    %v114 = vld [vmem:[#allocation2] sm:$0xff]
    %v115 = vld [vmem:[#allocation2 + $0x8] sm:$0xff]
    %v116 = vld [vmem:[#allocation2 + $0x10] sm:$0xff]
    %v117 = vld [vmem:[#allocation2 + $0x18] sm:$0xff]
    %v118 = vld [vmem:[#allocation2 + $0x20] sm:$0xff]
    %v119 = vld [vmem:[#allocation2 + $0x28] sm:$0xff]
    %v120 = vld [vmem:[#allocation2 + $0x30] sm:$0xff]
    %v121 = vld [vmem:[#allocation2 + $0x38] sm:$0xff]
    %v122 = vld [vmem:[#allocation5] sm:$0xff]
    %v123 = vld [vmem:[#allocation5 + $0x8] sm:$0xff]
    %v124 = vld [vmem:[#allocation5 + $0x10] sm:$0xff]
    %v125 = vld [vmem:[#allocation5 + $0x18] sm:$0xff]
    %v126 = vld [vmem:[#allocation5 + $0x20] sm:$0xff]
    %v127 = vld [vmem:[#allocation5 + $0x28] sm:$0xff]
    %v128 = vld [vmem:[#allocation5 + $0x30] sm:$0xff]
    %v129 = vld [vmem:[#allocation5 + $0x38] sm:$0xff]
    %v130 = vld [vmem:[#allocation7] sm:$0xff]
    %v131 = vld [vmem:[#allocation7 + $0x8] sm:$0xff]
    %v132 = vadd.f32 %v122, %v126
    %v133 = vadd.f32 %v123, %v127
    %v134 = vadd.f32 %v124, %v128
    %v135 = vadd.f32 %v125, %v129
    %v136 = vmul.f32 %v132, %v134
    %v137 = vmul.f32 %v133, %v135
    %v138 = vadd.f32 %v114, %v118
    %v139 = vadd.f32 %v115, %v119
    %v140 = vadd.f32 %v116, %v120
    %v141 = vadd.f32 %v117, %v121
    %v142 = vmul.f32 %v138, %v140
    %v143 = vmul.f32 %v139, %v141
    %v144 = vmin.f32 %v114, %v122
    %v145 = vmin.f32 %v115, %v123
    %v146 = vmin.f32 %v118, %v126
    %v147 = vmin.f32 %v119, %v127
    %v148 = vadd.f32 %v144, %v146
    %v149 = vadd.f32 %v145, %v147
    %v150 = vmin.f32 %v120, %v128
    %v151 = vmin.f32 %v121, %v129
    %v152 = vmin.f32 %v116, %v124
    %v153 = vmin.f32 %v117, %v125
    %v154 = vadd.f32 %v150, %v152
    %v155 = vadd.f32 %v151, %v153
    %v156 = vmul.f32 %v148, %v154
    %v157 = vmul.f32 %v149, %v155
    %v158 = vadd.f32 %v136, %v142
    %v159 = vadd.f32 %v137, %v143
    %v160 = vsub.f32 %v158, %v156
    %v161 = vsub.f32 %v159, %v157
    %v162 = vadd.f32 %v156, 1.0
    %v163 = vadd.f32 %v157, 1.0
    %v164 = vadd.f32 %v160, 1.0
    %v165 = vadd.f32 %v161, 1.0
    %v166 = vrcp.pop %v164
    %v167 = vmul.f32 %v164, %v166
    %v168 = vsub.f32 1.0, %v167
    %v169 = vmul.f32 %v166, %v168
    %v170 = vadd.f32 %v166, %v169
    %vm171 = vweird.f32 %v164
    %vm172 = vweird.f32 %v166
    %vm173 = vmor %vm171, %vm172
    %v174 = vsel %vm173, %v166, %v170
    %v175 = vand.u32 2147483647, %v164
    %vm176 = vcmp.eq.f32.partialorder %v175, 8.507059e+37
    %v177 = vand.u32 %v164, 2147483648
    %v178 = vor.u32 1.1754944e-38, %v177
    %v179 = vsel %vm176, %v178, %v174
    %v180 = vmul.f32 %v162, %v179
    %v181 = vrcp.pop %v165
    %v182 = vmul.f32 %v165, %v181
    %v183 = vsub.f32 1.0, %v182
    %v184 = vmul.f32 %v181, %v183
    %v185 = vadd.f32 %v181, %v184
    %vm186 = vweird.f32 %v165
    %vm187 = vweird.f32 %v181
    %vm188 = vmor %vm186, %vm187
    %v189 = vsel %vm188, %v181, %v185
    %v190 = vand.u32 2147483647, %v165
    %vm191 = vcmp.eq.f32.partialorder %v190, 8.507059e+37
    %v192 = vand.u32 %v165, 2147483648
    %v193 = vor.u32 1.1754944e-38, %v192
    %v194 = vsel %vm191, %v193, %v189
    %v195 = vmul.f32 %v163, %v194
    %v196 = vsub.f32 1.0, %v180
    %v197 = vsub.f32 1.0, %v195
    %vm198 = vcmp.gt.f32.partialorder %v130, 0.0
    %vm199 = vcmp.gt.f32.partialorder %v131, 0.0
    %v200 = vsel %vm198, 1, 0
    %v201 = vsel %vm199, 1, 0
    %v202 = vcvt.s32.f32 %v200
    %v203 = vcvt.s32.f32 %v201
    %v204 = vmul.f32 %v196, %v202
    %v205 = vmul.f32 %v197, %v203
    %v206 = vadd.f32 %v204, %v205
    %207 = vadd.xlane.f32.xlu0 %v206
    %v208 = vpop.xlane.xlu0 %207
    %v209 = vadd.f32 %v202, %v203
    %210 = vadd.xlane.f32.xlu0 %v209
    %v211 = vpop.xlane.xlu0 %210
    %vm212 = vcmask 7168
    %v213 = vsel %vm212, %v211, 0.0
    %214 = vadd.xlane.f32.xlu0 %v213
    %v215 = vpop.xlane.xlu0 %214
    %v216 = vrot.slane %v215, 4
    %v217 = vadd.f32 %v215, %v216
    %v218 = vrot.slane %v217, 2
    %v219 = vadd.f32 %v217, %v218
    %v220 = vrot.slane %v219, 1
    %v221 = vadd.f32 %v219, %v220
    %s222 = vtos %v221
    %v223 = vsel %vm212, %v208, 0.0
    %224 = vadd.xlane.f32.xlu0 %v223
    %v225 = vpop.xlane.xlu0 %224
    %v226 = vrot.slane %v225, 4
    %v227 = vadd.f32 %v225, %v226
    %v228 = vrot.slane %v227, 2
    %v229 = vadd.f32 %v227, %v228
    %v230 = vrot.slane %v229, 1
    %v231 = vadd.f32 %v229, %v230
    %s232 = vtos %v231
    %s233 = smax.f32 %s222, 1.0
    %v234 = vstv %s233
    %v235 = vrcp.pop %v234
    %v236 = vmul.f32 %v234, %v235
    %v237 = vsub.f32 1.0, %v236
    %v238 = vmul.f32 %v235, %v237
    %v239 = vadd.f32 %v235, %v238
    %vm240 = vweird.f32 %v234
    %vm241 = vweird.f32 %v235
    %vm242 = vmor %vm240, %vm241
    %v243 = vsel %vm242, %v235, %v239
    %v244 = vand.u32 2147483647, %v234
    %vm245 = vcmp.eq.f32.partialorder %v244, 8.507059e+37
    %v246 = vand.u32 %v234, 2147483648
    %v247 = vor.u32 1.1754944e-38, %v246
    %v248 = vsel %vm245, %v247, %v243
    %s249 = vtos %v248
    %s250 = smul.f32 %s232, %s249
    %s251 = sand.u32 2147483647, %s250
    %v252 = vld [vmem:[#allocation8] sm:$0xff]
    %v253 = vld [vmem:[#allocation8 + $0x8] sm:$0xff]
    %v254 = vld [vmem:[#allocation10] sm:$0xff]
    %v255 = vld [vmem:[#allocation10 + $0x8] sm:$0xff]
    %v256 = vmax.f32 %v252, 0.0
    %v257 = vmax.f32 %v253, 0.0
    %v258 = vmul.f32 %v252, %v254
    %v259 = vmul.f32 %v253, %v255
    %v260 = vsub.f32 %v256, %v258
    %v261 = vsub.f32 %v257, %v259
    %v262 = vand.u32 2147483647, %v252
    %v263 = vand.u32 2147483647, %v253
    %v264 = vsub.f32 0.0, %v262
    %v265 = vsub.f32 0.0, %v263
    %v266 = vmul.f32 %v264, 1.442695
    %v267 = vpow.pop %v266
    %v268 = vmul.f32 %v265, 1.442695
    %v269 = vpow.pop %v268
    %v270 = vadd.f32 %v267, 1.0
    %v271 = vlog2.pop %v270
    %v272 = vmul.f32 %v271, 0.6931472
    %v273 = vmul.f32 -0.5, %v267
    %v274 = vadd.f32 %v273, 1.0
    %v275 = vmul.f32 %v274, %v267
    %v276 = vand.u32 2147483647, %v267
    %vm277 = vcmp.lt.f32.partialorder %v276, 0.0004427343
    %v278 = vsel %vm277, %v275, %v272
    %v279 = vadd.f32 %v269, 1.0
    %v280 = vlog2.pop %v279
    %v281 = vmul.f32 %v280, 0.6931472
    %v282 = vmul.f32 -0.5, %v269
    %v283 = vadd.f32 %v282, 1.0
    %v284 = vmul.f32 %v283, %v269
    %v285 = vand.u32 2147483647, %v269
    %vm286 = vcmp.lt.f32.partialorder %v285, 0.0004427343
    %v287 = vsel %vm286, %v284, %v281
    %v288 = vadd.f32 %v260, %v278
    %v289 = vadd.f32 %v261, %v287
    %vm290 = vcmp.eq.f32.partialorder %v254, 1.0
    %vm291 = vcmp.eq.f32.partialorder %v255, 1.0
    %v292 = vsel %vm290, 1, 0
    %v293 = vsel %vm291, 1, 0
    %v294 = vcvt.s32.f32 %v292
    %v295 = vcvt.s32.f32 %v293
    %vm296 = vcmp.eq.f32.partialorder %v254, 0.0
    %vm297 = vcmp.eq.f32.partialorder %v255, 0.0
    %v298 = vsel %vm296, 1, 0
    %v299 = vsel %vm297, 1, 0
    %v300 = vcvt.s32.f32 %v298
    %v301 = vcvt.s32.f32 %v299
    %v302 = vmul.f32 %v288, %v294
    %v303 = vmul.f32 %v289, %v295
    %v304 = vadd.f32 %v302, %v303
    %305 = vadd.xlane.f32.xlu0 %v304
    %v306 = vpop.xlane.xlu0 %305
    %v307 = vmul.f32 %v288, %v300
    %v308 = vmul.f32 %v289, %v301
    %v309 = vadd.f32 %v307, %v308
    %310 = vadd.xlane.f32.xlu0 %v309
    %v311 = vpop.xlane.xlu0 %310
    %v312 = vadd.f32 %v294, %v295
    %313 = vadd.xlane.f32.xlu0 %v312
    %v314 = vpop.xlane.xlu0 %313
    %v315 = vadd.f32 %v300, %v301
    %316 = vadd.xlane.f32.xlu0 %v315
    %v317 = vpop.xlane.xlu0 %316
    %v318 = vsel %vm212, %v306, 0.0
    %319 = vadd.xlane.f32.xlu0 %v318
    %v320 = vpop.xlane.xlu0 %319
    %v321 = vrot.slane %v320, 4
    %v322 = vadd.f32 %v320, %v321
    %v323 = vrot.slane %v322, 2
    %v324 = vadd.f32 %v322, %v323
    %v325 = vrot.slane %v324, 1
    %v326 = vadd.f32 %v324, %v325
    %s327 = vtos %v326
    %v328 = vsel %vm212, %v314, 0.0
    %329 = vadd.xlane.f32.xlu0 %v328
    %v330 = vpop.xlane.xlu0 %329
    %v331 = vrot.slane %v330, 4
    %v332 = vadd.f32 %v330, %v331
    %v333 = vrot.slane %v332, 2
    %v334 = vadd.f32 %v332, %v333
    %v335 = vrot.slane %v334, 1
    %v336 = vadd.f32 %v334, %v335
    %s337 = vtos %v336
    %s338 = smax.f32 %s337, 1.0
    %v339 = vstv %s338
    %v340 = vrcp.pop %v339
    %v341 = vmul.f32 %v339, %v340
    %v342 = vsub.f32 1.0, %v341
    %v343 = vmul.f32 %v340, %v342
    %v344 = vadd.f32 %v340, %v343
    %vm345 = vweird.f32 %v339
    %vm346 = vweird.f32 %v340
    %vm347 = vmor %vm345, %vm346
    %v348 = vsel %vm347, %v340, %v344
    %v349 = vand.u32 2147483647, %v339
    %vm350 = vcmp.eq.f32.partialorder %v349, 8.507059e+37
    %v351 = vand.u32 %v339, 2147483648
    %v352 = vor.u32 1.1754944e-38, %v351
    %v353 = vsel %vm350, %v352, %v348
    %s354 = vtos %v353
    %s355 = smul.f32 %s327, %s354
    %v356 = vsel %vm212, %v311, 0.0
    %357 = vadd.xlane.f32.xlu0 %v356
    %v358 = vpop.xlane.xlu0 %357
    %v359 = vrot.slane %v358, 4
    %v360 = vadd.f32 %v358, %v359
    %v361 = vrot.slane %v360, 2
    %v362 = vadd.f32 %v360, %v361
    %v363 = vrot.slane %v362, 1
    %v364 = vadd.f32 %v362, %v363
    %s365 = vtos %v364
    %v366 = vsel %vm212, %v317, 0.0
    %367 = vadd.xlane.f32.xlu0 %v366
    %v368 = vpop.xlane.xlu0 %367
    %v369 = vrot.slane %v368, 4
    %v370 = vadd.f32 %v368, %v369
    %v371 = vrot.slane %v370, 2
    %v372 = vadd.f32 %v370, %v371
    %v373 = vrot.slane %v372, 1
    %v374 = vadd.f32 %v372, %v373
    %s375 = vtos %v374
    %s376 = smax.f32 %s375, 1.0
    %v377 = vstv %s376
    %v378 = vrcp.pop %v377
    %v379 = vmul.f32 %v377, %v378
    %v380 = vsub.f32 1.0, %v379
    %v381 = vmul.f32 %v378, %v380
    %v382 = vadd.f32 %v378, %v381
    %vm383 = vweird.f32 %v377
    %vm384 = vweird.f32 %v378
    %vm385 = vmor %vm383, %vm384
    %v386 = vsel %vm385, %v378, %v382
    %v387 = vand.u32 2147483647, %v377
    %vm388 = vcmp.eq.f32.partialorder %v387, 8.507059e+37
    %v389 = vand.u32 %v377, 2147483648
    %v390 = vor.u32 1.1754944e-38, %v389
    %v391 = vsel %vm388, %v390, %v386
    %s392 = vtos %v391
    %s393 = smul.f32 %s365, %s392
    %s394 = smul.f32 %s355, 0.5
    %s395 = smul.f32 %s393, 0.5
    %s396 = sadd.f32 %s394, %s395
    %v397 = vld [vmem:[%s6] sm:$0xff]
    %v398 = vld [vmem:[%s6 + $0x8] sm:$0xff]
    %v399 = vld [vmem:[%s6 + $0x10] sm:$0xff]
    %v400 = vld [vmem:[%s6 + $0x18] sm:$0xff]
    %v401 = vld [vmem:[#allocation11] sm:$0xff]
    %v402 = vld [vmem:[#allocation11 + $0x8] sm:$0xff]
    %v403 = vld [vmem:[#allocation11 + $0x10] sm:$0xff]
    %v404 = vld [vmem:[#allocation11 + $0x18] sm:$0xff]
    %v405 = vld [vmem:[%s5] sm:$0xff]
    %v406 = vld [vmem:[%s5 + $0x8] sm:$0xff]
    %v407 = vld [vmem:[%s5 + $0x10] sm:$0xff]
    %v408 = vld [vmem:[%s5 + $0x18] sm:$0xff]
    %vm409 = vcmp.eq.f32.partialorder %v405, 1.0
    %vm410 = vcmp.eq.f32.partialorder %v406, 1.0
    %vm411 = vcmp.eq.f32.partialorder %v407, 1.0
    %vm412 = vcmp.eq.f32.partialorder %v408, 1.0
    %v413 = vsel %vm409, 1, 0
    %v414 = vsel %vm410, 1, 0
    %v415 = vsel %vm411, 1, 0
    %v416 = vsel %vm412, 1, 0
    %v417 = vcvt.s32.f32 %v413
    %v418 = vcvt.s32.f32 %v414
    %v419 = vcvt.s32.f32 %v415
    %v420 = vcvt.s32.f32 %v416
    %vm421 = vcmp.eq.f32.partialorder %v405, 0.0
    %vm422 = vcmp.eq.f32.partialorder %v406, 0.0
    %vm423 = vcmp.eq.f32.partialorder %v407, 0.0
    %vm424 = vcmp.eq.f32.partialorder %v408, 0.0
    %v425 = vsel %vm421, 1, 0
    %v426 = vsel %vm422, 1, 0
    %v427 = vsel %vm423, 1, 0
    %v428 = vsel %vm424, 1, 0
    %v429 = vcvt.s32.f32 %v425
    %v430 = vcvt.s32.f32 %v426
    %v431 = vcvt.s32.f32 %v427
    %v432 = vcvt.s32.f32 %v428
    %v433 = vsel %vm212, %v417, 0.0
    %v434 = vsel %vm212, %v418, 0.0
    %v435 = vadd.f32 %v433, %v434
    %v436 = vsel %vm212, %v419, 0.0
    %v437 = vadd.f32 %v435, %v436
    %v438 = vsel %vm212, %v420, 0.0
    %v439 = vadd.f32 %v437, %v438
    %440 = vadd.xlane.f32.xlu0 %v439
    %v441 = vpop.xlane.xlu0 %440
    %v442 = vrot.slane %v441, 4
    %v443 = vadd.f32 %v441, %v442
    %v444 = vrot.slane %v443, 2
    %v445 = vadd.f32 %v443, %v444
    %v446 = vrot.slane %v445, 1
    %v447 = vadd.f32 %v445, %v446
    %s448 = vtos %v447
    %s449 = smul.f32 %s448, 0.25
    %v450 = vsel %vm212, %v429, 0.0
    %v451 = vsel %vm212, %v430, 0.0
    %v452 = vadd.f32 %v450, %v451
    %v453 = vsel %vm212, %v431, 0.0
    %v454 = vadd.f32 %v452, %v453
    %v455 = vsel %vm212, %v432, 0.0
    %v456 = vadd.f32 %v454, %v455
    %457 = vadd.xlane.f32.xlu0 %v456
    %v458 = vpop.xlane.xlu0 %457
    %v459 = vrot.slane %v458, 4
    %v460 = vadd.f32 %v458, %v459
    %v461 = vrot.slane %v460, 2
    %v462 = vadd.f32 %v460, %v461
    %v463 = vrot.slane %v462, 1
    %v464 = vadd.f32 %v462, %v463
    %s465 = vtos %v464
    %s466 = smul.f32 %s465, 0.25
    %v467 = vmul.f32 %v397, %v401
    %v468 = vmul.f32 %v398, %v402
    %v469 = vmul.f32 %v399, %v403
    %v470 = vmul.f32 %v400, %v404
    %471 = vadd.xlane.f32.xlu0 %v467
    %v472 = vpop.xlane.xlu0 %471
    %473 = vadd.xlane.f32.xlu0 %v468
    %v474 = vpop.xlane.xlu0 %473
    %475 = vadd.xlane.f32.xlu0 %v469
    %v476 = vpop.xlane.xlu0 %475
    %477 = vadd.xlane.f32.xlu0 %v470
    %v478 = vpop.xlane.xlu0 %477
    %v479 = vmul.f32 %v397, %v397
    %v480 = vmul.f32 %v398, %v398
    %v481 = vmul.f32 %v399, %v399
    %v482 = vmul.f32 %v400, %v400
    %483 = vadd.xlane.f32.xlu0 %v479
    %v484 = vpop.xlane.xlu0 %483
    %485 = vadd.xlane.f32.xlu0 %v480
    %v486 = vpop.xlane.xlu0 %485
    %487 = vadd.xlane.f32.xlu0 %v481
    %v488 = vpop.xlane.xlu0 %487
    %489 = vadd.xlane.f32.xlu0 %v482
    %v490 = vpop.xlane.xlu0 %489
    %v491 = vmul.f32 %v401, %v401
    %v492 = vmul.f32 %v402, %v402
    %v493 = vmul.f32 %v403, %v403
    %v494 = vmul.f32 %v404, %v404
    %495 = vadd.xlane.f32.xlu0 %v491
    %v496 = vpop.xlane.xlu0 %495
    %497 = vadd.xlane.f32.xlu0 %v492
    %v498 = vpop.xlane.xlu0 %497
    %499 = vadd.xlane.f32.xlu0 %v493
    %v500 = vpop.xlane.xlu0 %499
    %501 = vadd.xlane.f32.xlu0 %v494
    %v502 = vpop.xlane.xlu0 %501
    %v503 = vmax.f32 %v484, 1e-16
    %v504 = vmax.f32 %v486, 1e-16
    %v505 = vmax.f32 %v488, 1e-16
    %v506 = vmax.f32 %v490, 1e-16
    %v507 = vmax.f32 %v496, 1e-16
    %v508 = vmax.f32 %v498, 1e-16
    %v509 = vmax.f32 %v500, 1e-16
    %v510 = vmax.f32 %v502, 1e-16
    %v511 = vmul.f32 %v503, %v507
    %v512 = vmul.f32 %v504, %v508
    %v513 = vmul.f32 %v505, %v509
    %v514 = vmul.f32 %v506, %v510
    %v515 = vrsqrt.pop %v511
    %v516 = vmul.f32 %v515, %v511
    %v517 = vmul.f32 %v516, %v515
    %v518 = vmul.f32 0.5, %v517
    %v519 = vsub.f32 1.5, %v518
    %v520 = vmul.f32 %v515, %v519
    %vm521 = vweird.f32 %v511
    %vm522 = vweird.f32 %v515
    %vm523 = vmor %vm521, %vm522
    %v524 = vsel %vm523, %v515, %v520
    %v525 = vrsqrt.pop %v512
    %v526 = vmul.f32 %v525, %v512
    %v527 = vmul.f32 %v526, %v525
    %v528 = vmul.f32 0.5, %v527
    %v529 = vsub.f32 1.5, %v528
    %v530 = vmul.f32 %v525, %v529
    %vm531 = vweird.f32 %v512
    %vm532 = vweird.f32 %v525
    %vm533 = vmor %vm531, %vm532
    %v534 = vsel %vm533, %v525, %v530
    %v535 = vrsqrt.pop %v513
    %v536 = vmul.f32 %v535, %v513
    %v537 = vmul.f32 %v536, %v535
    %v538 = vmul.f32 0.5, %v537
    %v539 = vsub.f32 1.5, %v538
    %v540 = vmul.f32 %v535, %v539
    %vm541 = vweird.f32 %v513
    %vm542 = vweird.f32 %v535
    %vm543 = vmor %vm541, %vm542
    %v544 = vsel %vm543, %v535, %v540
    %v545 = vrsqrt.pop %v514
    %v546 = vmul.f32 %v545, %v514
    %v547 = vmul.f32 %v546, %v545
    %v548 = vmul.f32 0.5, %v547
    %v549 = vsub.f32 1.5, %v548
    %v550 = vmul.f32 %v545, %v549
    %vm551 = vweird.f32 %v514
    %vm552 = vweird.f32 %v545
    %vm553 = vmor %vm551, %vm552
    %v554 = vsel %vm553, %v545, %v550
    %v555 = vmul.f32 %v472, %v524
    %v556 = vmul.f32 %v474, %v534
    %v557 = vmul.f32 %v476, %v544
    %v558 = vmul.f32 %v478, %v554
    %v559 = vlaneseq
    %v560 = vshrl.u32 %v559, 7
    %v561 = vadd.s32 %v560, 8
    %v562 = vadd.s32 %v560, 16
    %v563 = vadd.s32 %v560, 24
    %vm564 = vcmp.lt.s32.totalorder %v560, 16
    %vm565 = vcmp.lt.s32.totalorder %v561, 16
    %vm566 = vcmp.lt.s32.totalorder %v562, 16
    %vm567 = vcmp.lt.s32.totalorder %v563, 16
    %v568 = vsel %vm564, 1, 0
    %v569 = vsel %vm565, 1, 0
    %v570 = vsel %vm566, 1, 0
    %v571 = vsel %vm567, 1, 0
    %v572 = vcvt.s32.f32 %v568
    %v573 = vcvt.s32.f32 %v569
    %v574 = vcvt.s32.f32 %v570
    %v575 = vcvt.s32.f32 %v571
    %v576 = vsub.f32 1.0, %v572
    %v577 = vsub.f32 1.0, %v573
    %v578 = vsub.f32 1.0, %v574
    %v579 = vsub.f32 1.0, %v575
    %v580 = vmul.f32 %v555, %v417
    %v581 = vmul.f32 %v556, %v418
    %v582 = vmul.f32 %v557, %v419
    %v583 = vmul.f32 %v558, %v420
    %v584 = vmul.f32 %v580, %v572
    %v585 = vmul.f32 %v581, %v573
    %v586 = vmul.f32 %v582, %v574
    %v587 = vmul.f32 %v583, %v575
    %v588 = vsel %vm212, %v584, 0.0
    %v589 = vsel %vm212, %v585, 0.0
    %v590 = vadd.f32 %v588, %v589
    %v591 = vsel %vm212, %v586, 0.0
    %v592 = vadd.f32 %v590, %v591
    %v593 = vsel %vm212, %v587, 0.0
    %v594 = vadd.f32 %v592, %v593
    %595 = vadd.xlane.f32.xlu0 %v594
    %v596 = vpop.xlane.xlu0 %595
    %v597 = vrot.slane %v596, 4
    %v598 = vadd.f32 %v596, %v597
    %v599 = vrot.slane %v598, 2
    %v600 = vadd.f32 %v598, %v599
    %v601 = vrot.slane %v600, 1
    %v602 = vadd.f32 %v600, %v601
    %s603 = vtos %v602
    %v604 = vmul.f32 %v580, %v576
    %v605 = vmul.f32 %v581, %v577
    %v606 = vmul.f32 %v582, %v578
    %v607 = vmul.f32 %v583, %v579
    %v608 = vsel %vm212, %v604, 0.0
    %v609 = vsel %vm212, %v605, 0.0
    %v610 = vadd.f32 %v608, %v609
    %v611 = vsel %vm212, %v606, 0.0
    %v612 = vadd.f32 %v610, %v611
    %v613 = vsel %vm212, %v607, 0.0
    %v614 = vadd.f32 %v612, %v613
    %615 = vadd.xlane.f32.xlu0 %v614
    %v616 = vpop.xlane.xlu0 %615
    %v617 = vrot.slane %v616, 4
    %v618 = vadd.f32 %v616, %v617
    %v619 = vrot.slane %v618, 2
    %v620 = vadd.f32 %v618, %v619
    %v621 = vrot.slane %v620, 1
    %v622 = vadd.f32 %v620, %v621
    %s623 = vtos %v622
    %v624 = vmul.f32 %v555, %v429
    %v625 = vmul.f32 %v556, %v430
    %v626 = vmul.f32 %v557, %v431
    %v627 = vmul.f32 %v558, %v432
    %v628 = vmul.f32 %v624, %v572
    %v629 = vmul.f32 %v625, %v573
    %v630 = vmul.f32 %v626, %v574
    %v631 = vmul.f32 %v627, %v575
    %v632 = vsel %vm212, %v628, 0.0
    %v633 = vsel %vm212, %v629, 0.0
    %v634 = vadd.f32 %v632, %v633
    %v635 = vsel %vm212, %v630, 0.0
    %v636 = vadd.f32 %v634, %v635
    %v637 = vsel %vm212, %v631, 0.0
    %v638 = vadd.f32 %v636, %v637
    %639 = vadd.xlane.f32.xlu0 %v638
    %v640 = vpop.xlane.xlu0 %639
    %v641 = vrot.slane %v640, 4
    %v642 = vadd.f32 %v640, %v641
    %v643 = vrot.slane %v642, 2
    %v644 = vadd.f32 %v642, %v643
    %v645 = vrot.slane %v644, 1
    %v646 = vadd.f32 %v644, %v645
    %s647 = vtos %v646
    %s648 = smax.f32 %s449, 1.0
    %v649 = vstv %s648
    %v650 = vrcp.pop %v649
    %v651 = vmul.f32 %v649, %v650
    %v652 = vsub.f32 1.0, %v651
    %v653 = vmul.f32 %v650, %v652
    %v654 = vadd.f32 %v650, %v653
    %vm655 = vweird.f32 %v649
    %vm656 = vweird.f32 %v650
    %vm657 = vmor %vm655, %vm656
    %v658 = vsel %vm657, %v650, %v654
    %v659 = vand.u32 2147483647, %v649
    %vm660 = vcmp.eq.f32.partialorder %v659, 8.507059e+37
    %v661 = vand.u32 %v649, 2147483648
    %v662 = vor.u32 1.1754944e-38, %v661
    %v663 = vsel %vm660, %v662, %v658
    %s664 = vtos %v663
    %s665 = smax.f32 %s466, 1.0
    %v666 = vstv %s665
    %v667 = vrcp.pop %v666
    %v668 = vmul.f32 %v666, %v667
    %v669 = vsub.f32 1.0, %v668
    %v670 = vmul.f32 %v667, %v669
    %v671 = vadd.f32 %v667, %v670
    %vm672 = vweird.f32 %v666
    %vm673 = vweird.f32 %v667
    %vm674 = vmor %vm672, %vm673
    %v675 = vsel %vm674, %v667, %v671
    %v676 = vand.u32 2147483647, %v666
    %vm677 = vcmp.eq.f32.partialorder %v676, 8.507059e+37
    %v678 = vand.u32 %v666, 2147483648
    %v679 = vor.u32 1.1754944e-38, %v678
    %v680 = vsel %vm677, %v679, %v675
    %s681 = vtos %v680
    %s682 = smul.f32 %s603, %s664
    %s683 = smul.f32 %s682, 0.5
    %s684 = ssub.f32 1.0, %s683
    %s685 = smul.f32 %s684, 0.5
    %s686 = smul.f32 %s623, %s664
    %s687 = smul.f32 %s686, 0.5
    %s688 = ssub.f32 1.0, %s687
    %s689 = smul.f32 %s688, 0.5
    %p690 = scmp.gt.f32.partialorder %s466, 0.0
    %s691 = scalar_select %p690, 1, 0
    %s692 = scvt.s32.f32 %s691
    %s693 = smul.f32 %s647, %s681
    %s694 = smul.f32 %s693, 0.5
    %s695 = sadd.f32 %s694, 1.0
    %s696 = smul.f32 %s695, 0.25
    %s697 = smul.f32 %s692, %s696
    %v698 = vlaneseq
    %v699 = vand.u32 %v698, 127
    %vm700 = vcmp.eq.s32.totalorder %v699, 0
    %v701 = vstv %s396
    %v702 = vsel %vm700, %v701, 0.0
    %vm703 = vcmp.eq.s32.totalorder %v699, 1
    %s704 = smul.f32 %s251, 3.0
    %v705 = vstv %s704
    %v706 = vsel %vm703, %v705, 0.0
    %v707 = vadd.f32 %v702, %v706
    %vm708 = vcmp.eq.s32.totalorder %v699, 2
    %v709 = vstv %s685
    %v710 = vsel %vm708, %v709, 0.0
    %v711 = vadd.f32 %v707, %v710
    %vm712 = vcmp.eq.s32.totalorder %v699, 3
    %v713 = vstv %s689
    %v714 = vsel %vm712, %v713, 0.0
    %v715 = vadd.f32 %v711, %v714
    %vm716 = vcmp.eq.s32.totalorder %v699, 4
    %v717 = vstv %s697
    %v718 = vsel %vm716, %v717, 0.0
    %v719 = vadd.f32 %v715, %v718
    %720 = vst [vmem:[#allocation13] sm:$0x1] %v719
    // Predicated region
    $region58: #{tpu_custom_call.1} parent=1 // pred_check
      _
    $region59: #{tpu_custom_call.1} parent=1 // pred_check_branch
      %722 = sbr.rel (0) target = $region61
    $region60: #{tpu_custom_call.1} parent=1 // pred_region
      %724 = vsyncadd [#allocation4], 0
      %s726 = sshll.u32 [#allocation13], 4
      %s727 = int_to_ptr.vmem [resolvable:$true] %s726
      %s728 = sshll.u32 %s8, 4
      %s729 = int_to_ptr.hbm [resolvable:$true] %s728
      %731 = dma.vmem_to_hbm [thread:$0]  %s727, 16, %s729, [#allocation4]
    $region61: #{tpu_custom_call.1} parent=1 // pred_fallthru
      _
    // Predicated region
    $region62: #{tpu_custom_call.1} parent=1 // pred_check
      _
    $region63: #{tpu_custom_call.1} parent=1 // pred_check_branch
      %733 = sbr.rel (0) target = $region65
    $region64: #{tpu_custom_call.1} parent=1 // pred_region
      %735 = dma.done [#allocation4], 16
    $region65: #{tpu_custom_call.1} parent=1 // pred_fallthru
      _
    %736 = vsyncpa [#allocation3], 1
    %737 = vsyncpa [#allocation6], 1
    %738 = vsyncpa [#allocation9], 1
    %739 = vsyncpa [#allocation12], 1
    %740 = vsyncpa [#allocation4], 1

</llo_original>
